<compile_context>
chip_gen: v5e
topology: v5e:2x2
jax: 0.10.0
libtpu: 0.0.40
codegen_flags: <defaults>
</compile_context>

<pallas_src>
import jax
import jax.numpy as jnp
from jax.experimental import pallas as pl
from jax.experimental.pallas import tpu as pltpu

KSIZE = 7
PAD = KSIZE // 2


def _round_up(x, m):
    return (x + m - 1) // m * m


def _pick_hw_tile(hw, cap=4096):
    """Lane-dense spatial tile: a multiple-of-128 divisor of hw, else full hw."""
    if hw <= cap:
        return hw
    t = cap - (cap % 128)
    while t >= 128:
        if hw % t == 0:
            return t
        t -= 128
    return hw


def _pick_c_block(c, hw_tile, itemsize, whole_cap, stream_cap):
    """Channel block: whole C if one step per (batch, tile) fits the budget,
    else the largest multiple-of-8 divisor of C giving a ~stream_cap block."""
    if c * hw_tile * itemsize <= whole_cap:
        return c
    divs = [d for d in range(8, c, 8) if c % d == 0]
    good = [d for d in divs if d * hw_tile * itemsize <= stream_cap]
    if good:
        return max(good)
    if divs:
        return min(divs)
    # No multiple-of-8 divisor (prime / awkward C): fall back to one whole-C
    # block (always correct; VMEM limit is sized from the actual block below).
    return c


def _channel_pool(x, *, hw_tile_cap=4096, stream_cap=2 << 20):
    """(B, C, H, W) -> (B, 2, H, W) f32 with plane 0 = channel max, 1 = mean."""
    B, C, H, W = x.shape
    HW = H * W
    itemsize = x.dtype.itemsize

    try:
        vmem_cap = int(pltpu.get_tpu_info().vmem_capacity_bytes)
    except Exception:
        vmem_cap = 64 << 20  # conservative (v7x per-TC)
    # On 128 MiB-VMEM parts (v5e/v6e) allow one step to cover the whole
    # per-batch slab; on v7x keep double-buffered blocks smaller.
    whole_cap = (8 << 20) if vmem_cap >= (96 << 20) else (4 << 20)

    HW_TILE = _pick_hw_tile(HW, hw_tile_cap)
    NS = HW // HW_TILE
    C_BLK = _pick_c_block(C, HW_TILE, itemsize, whole_cap, stream_cap)
    NC = C // C_BLK
    inv_c = 1.0 / C

    x_flat = x.reshape(B, C, HW)  # contiguous -> free, lane-dense last dim

    def kernel(x_ref, o_ref):
        xb = x_ref[0].astype(jnp.float32)            # (C_BLK, HW_TILE)
        bm = jnp.max(xb, axis=0, keepdims=True)      # (1, HW_TILE)
        bs = jnp.sum(xb, axis=0, keepdims=True)      # (1, HW_TILE)

        if NC == 1:
            # One channel block per (batch, tile): no accumulator carry needed.
            o_ref[0, 0:1, :] = bm
            o_ref[0, 1:2, :] = bs * jnp.float32(inv_c)
        else:
            # NOTE: correctness relies on ci being the innermost ("arbitrary")
            # grid axis and the output index_map collapsing ci, so the output
            # block stays VMEM-resident across the channel reduction.
            ci = pl.program_id(2)

            @pl.when(ci == 0)
            def _():
                o_ref[0, 0:1, :] = bm
                o_ref[0, 1:2, :] = bs

            @pl.when(ci > 0)
            def _():
                o_ref[0, 0:1, :] = jnp.maximum(o_ref[0, 0:1, :], bm)
                o_ref[0, 1:2, :] = o_ref[0, 1:2, :] + bs

            @pl.when(ci == NC - 1)
            def _():
                o_ref[0, 1:2, :] = o_ref[0, 1:2, :] * jnp.float32(inv_c)

    blk_bytes = C_BLK * HW_TILE * itemsize
    out_blk_bytes = 2 * HW_TILE * 4
    need = 2 * blk_bytes + 2 * out_blk_bytes + (2 << 20)   # double-buffered + slack
    vmem_limit = int(min(max(need, 16 << 20), 64 << 20))

    pooled = pl.pallas_call(
        kernel,
        out_shape=jax.ShapeDtypeStruct((B, 2, HW), jnp.float32),
        grid=(B, NS, NC),
        in_specs=[pl.BlockSpec((1, C_BLK, HW_TILE),
                               lambda bi, si, ci: (bi, ci, si))],
        out_specs=pl.BlockSpec((1, 2, HW_TILE),
                               lambda bi, si, ci: (bi, 0, si)),
        compiler_params=pltpu.CompilerParams(
            dimension_semantics=("parallel", "parallel", "arbitrary"),
            vmem_limit_bytes=vmem_limit,
        ),
    )(x_flat)
    return pooled.reshape(B, 2, H, W)


def _conv7x7_sigmoid(pooled, conv_w, conv_b, out_dtype):
    """(B, 2, H, W) f32 planes -> sigmoid(conv7x7(planes) + b) : (B, 1, H, W)."""
    B, _, H, W = pooled.shape
    HP = _round_up(H + 2 * PAD, 8)    # sublane-padded plane height
    WP = _round_up(W + PAD, 128)      # lane-aligned width, zero slack >= PAD
    # Load-bearing invariants: wrapped lanes from the rolls must land in zeros.
    assert WP >= W + PAD and HP >= H + 2 * PAD

    # Flattened weights, order [plane, kh, kw]; plane 0 = max map, 1 = mean map.
    w_flat = conv_w.reshape(-1).astype(jnp.float32)   # (2*K*K,)
    b = conv_b.reshape(1).astype(jnp.float32)         # (1,)

    def kernel(p_ref, w_ref, b_ref, o_ref, roll_sc):
        # roll_sc[p, kw] holds the kw-column-shifted, zero-padded plane p.
        # Base (unshifted) plane lives in the kw == PAD slot.
        for p in range(2):
            roll_sc[p, PAD] = jnp.zeros((HP, WP), jnp.float32)
            roll_sc[p, PAD, PAD:PAD + H, 0:W] = p_ref[0, p]
        # Hoisted column shifts: 12 XLU lane rotations total (once per batch).
        for p in range(2):
            base = roll_sc[p, PAD]                      # (HP, WP)
            for kw in range(KSIZE):
                if kw == PAD:
                    continue
                roll_sc[p, kw] = pltpu.roll(base, (PAD - kw) % WP, axis=1)

        # 98-tap accumulation via sublane-offset loads of the pre-rolled planes.
        accs = []
        for p in range(2):
            acc = jnp.zeros((H, WP), jnp.float32)
            for kw in range(KSIZE):
                for kh in range(KSIZE):
                    wgt = w_ref[p * KSIZE * KSIZE + kh * KSIZE + kw]
                    acc = acc + wgt * roll_sc[p, kw, kh:kh + H, :]
            accs.append(acc)

        res = jax.nn.sigmoid(accs[0] + accs[1] + b_ref[0])
        o_ref[0, 0] = res[:, 0:W].astype(o_ref.dtype)

    roll_bytes = 2 * KSIZE * HP * WP * 4
    io_bytes = 2 * (2 * H * W * 4 + H * W * jnp.dtype(out_dtype).itemsize)
    need = roll_bytes + io_bytes + (2 << 20)
    vmem_limit = int(min(max(need, 16 << 20), 64 << 20))

    return pl.pallas_call(
        kernel,
        out_shape=jax.ShapeDtypeStruct((B, 1, H, W), out_dtype),
        grid=(B,),
        in_specs=[
            pl.BlockSpec((1, 2, H, W), lambda bi: (bi, 0, 0, 0)),
            pl.BlockSpec(memory_space=pltpu.MemorySpace.SMEM),
            pl.BlockSpec(memory_space=pltpu.MemorySpace.SMEM),
        ],
        out_specs=pl.BlockSpec((1, 1, H, W), lambda bi: (bi, 0, 0, 0)),
        scratch_shapes=[pltpu.VMEM((2, KSIZE, HP, WP), jnp.float32)],
        compiler_params=pltpu.CompilerParams(
            dimension_semantics=("parallel",),
            vmem_limit_bytes=vmem_limit,
        ),
    )(pooled, w_flat, b)


def spatial_attention(x, conv_w, conv_b):
    """x: (B, C, H, W); conv_w: (1, 2, K, K); conv_b: (1,) -> (B, 1, H, W)."""
    pooled = _channel_pool(x)
    return _conv7x7_sigmoid(pooled, conv_w, conv_b, x.dtype)


def spatial_attention_ref(x, conv_w, conv_b):
    # Pure-JAX reference matching the PyTorch module semantics.
    max_c = jnp.max(x, axis=1, keepdims=True)
    avg_c = jnp.mean(x, axis=1, keepdims=True)
    inp = jnp.concatenate([max_c, avg_c], axis=1)      # max first, then avg
    out = jax.lax.conv_general_dilated(
        inp, conv_w, window_strides=(1, 1),
        padding=[(PAD, PAD), (PAD, PAD)],
        dimension_numbers=("NCHW", "OIHW", "NCHW"),
    )
    return jax.nn.sigmoid(out + conv_b.reshape(1, 1, 1, 1))


if __name__ == "__main__":
    key = jax.random.PRNGKey(0)
    kx, kw, kb = jax.random.split(key, 3)

    B, C, H, W = 2, 4, 16, 16
    x = jax.random.normal(kx, (B, C, H, W), dtype=jnp.float32)

    # Deterministic synthetic parameters (nn.Conv2d(2, 1, 7, padding=3) shapes).
    fan_in = 2 * KSIZE * KSIZE
    bound = 1.0 / (fan_in ** 0.5)
    conv_w = jax.random.uniform(kw, (1, 2, KSIZE, KSIZE), jnp.float32,
                                minval=-bound, maxval=bound)
    conv_b = jax.random.uniform(kb, (1,), jnp.float32, minval=-bound, maxval=bound)

    out = spatial_attention(x, conv_w, conv_b)
    out = jax.block_until_ready(out)

    ref = spatial_attention_ref(x, conv_w, conv_b)
    assert out.shape == (B, 1, H, W)
    assert jnp.allclose(out, ref, atol=1e-5, rtol=1e-5), "mismatch vs reference"

    print("KERNEL_OK")
</pallas_src>

<mosaic_0001>
module attributes {stable_mosaic.version = 11 : i64} {
  func.func @kernel(%arg0: i32, %arg1: i32, %arg2: i32, %arg3: memref<1x4x256xf32, #tpu.memory_space<vmem>>, %arg4: memref<1x2x256xf32, #tpu.memory_space<vmem>>) attributes {dimension_semantics = [#tpu.dimension_semantics<parallel>, #tpu.dimension_semantics<parallel>, #tpu.dimension_semantics<arbitrary>], iteration_bounds = array<i64: 2, 1, 1>, scalar_prefetch = 0 : i64, scratch_operands = 0 : i64, tpu.core_type = #tpu.core_type<tc>, window_params = [{transform_indices = @transform_0, window_bounds = array<i64: 1, 4, 256>}, {transform_indices = @transform_1, window_bounds = array<i64: 1, 2, 256>}]} {
    %c0 = arith.constant 0 : index
    %c0_0 = arith.constant 0 : index
    %c0_1 = arith.constant 0 : index
    %0 = vector.load %arg3[%c0, %c0_0, %c0_1] : memref<1x4x256xf32, #tpu.memory_space<vmem>>, vector<1x4x256xf32>
    %1 = vector.shape_cast %0 : vector<1x4x256xf32> to vector<4x256xf32>
    %cst = arith.constant dense<0xFF800000> : vector<256xf32>
    %2 = vector.multi_reduction <maximumf>, %1, %cst [0] : vector<4x256xf32> to vector<256xf32>
    %3 = vector.shape_cast %2 : vector<256xf32> to vector<1x256xf32>
    %cst_2 = arith.constant dense<0.000000e+00> : vector<256xf32>
    %4 = vector.multi_reduction <add>, %1, %cst_2 [0] : vector<4x256xf32> to vector<256xf32>
    %5 = vector.shape_cast %4 : vector<256xf32> to vector<1x256xf32>
    %c0_3 = arith.constant 0 : index
    %c0_4 = arith.constant 0 : index
    %c0_5 = arith.constant 0 : index
    %6 = vector.load %arg4[%c0_3, %c0_4, %c0_5] : memref<1x2x256xf32, #tpu.memory_space<vmem>>, vector<1x1x256xf32>
    %7 = vector.shape_cast %6 : vector<1x1x256xf32> to vector<1x256xf32>
    %8 = vector.shape_cast %3 : vector<1x256xf32> to vector<1x1x256xf32>
    tpu.vector_store %arg4[%c0_3, %c0_4, %c0_5], %8 {strides = array<i32>} : memref<1x2x256xf32, #tpu.memory_space<vmem>>, vector<1x1x256xf32>,
    %cst_6 = arith.constant 2.500000e-01 : f32
    %9 = vector.broadcast %cst_6 : f32 to vector<1x256xf32>
    %10 = arith.mulf %5, %9 : vector<1x256xf32>
    %c0_7 = arith.constant 0 : index
    %c1 = arith.constant 1 : index
    %c0_8 = arith.constant 0 : index
    %11 = vector.load %arg4[%c0_7, %c1, %c0_8] : memref<1x2x256xf32, #tpu.memory_space<vmem>>, vector<1x1x256xf32>
    %12 = vector.shape_cast %11 : vector<1x1x256xf32> to vector<1x256xf32>
    %13 = vector.shape_cast %10 : vector<1x256xf32> to vector<1x1x256xf32>
    tpu.vector_store %arg4[%c0_7, %c1, %c0_8], %13 {strides = array<i32>} : memref<1x2x256xf32, #tpu.memory_space<vmem>>, vector<1x1x256xf32>,
    return
  }
  func.func @transform_0(%arg0: i32, %arg1: i32, %arg2: i32) -> (i32, i32, i32) {
    %c0_i32 = arith.constant 0 : i32
    return %arg0, %arg2, %arg1 : i32, i32, i32
  }
  func.func @transform_1(%arg0: i32, %arg1: i32, %arg2: i32) -> (i32, i32, i32) {
    %c0_i32 = arith.constant 0 : i32
    %c0_i32_0 = arith.constant 0 : i32
    return %arg0, %c0_i32, %arg1 : i32, i32, i32
  }
}

</mosaic_0001>

<llo_original>
// kernel: tpu_custom_call.1
$region0: #{tpu_custom_call.1}
  #allocation0 [shape = 'u32[]', space=smem, size = 0x4, offset = 0x4, fixed_abs, tag = 'smem constant byte address 0x4 - core index']
  #allocation1 [shape = 'u32[72,128]{1,0:T(1,128)}', space=vmem, size = 0x9000, scoped, tag = 'internal scratch']
  %s0 = inlined_call_operand.hbm [shape: f32[2,4,256], index: 0, kind: input, shape index: {}]
  %s1 = inlined_call_operand.hbm [shape: f32[2,2,256], index: 1, kind: output, shape index: {}]
  %s2 = sld [smem:[#allocation0]]
  $region41: #{tpu_custom_call.1} parent=0
    _
  %s4 = ssub.s32 1, %s2
  %s5 = scalar_select 0, %s4, %s2
  $region1: #{tpu_custom_call.1} parent=0
    #allocation2 [shape = 'u8[8192]{0}', space=vmem, size = 0x2000, scoped, tag = 'input window, operand 0']
    #allocation3 [shape = 's32[2]{0}', space=sflag, size = 0x8, scoped, tag = 'scoped memory for tpu_custom_call.1']
    #allocation4 [shape = 's32[2]{0}', space=sflag, size = 0x8, scoped, tag = 'scoped memory for tpu_custom_call.1']
    #allocation5 [shape = 'u8[4096]{0}', space=vmem, size = 0x1000, scoped, tag = 'output window, operand 0']
    %6 = vsyncpa [#allocation3], 0
    %s7 = scalar_lea.sflag [#allocation3], 1
    %8 = vsyncpa %s7, 0
    %9 = vsyncpa [#allocation4], 0
    %s10 = scalar_lea.sflag [#allocation4], 1
    %11 = vsyncpa %s10, 0
    loop: start=0, step=1, limit=4
    $region2: #{tpu_custom_call.1} parent=1 // loop_pre_header
      _
    $region3: #{tpu_custom_call.1} parent=1 // loop_header
      %s13 = sphi 0, %s17
      %p14 = scmp.ge.s32.totalorder %s13, 4
      %s20 = sphi 0, %s39
      %s21 = sphi 0, %s35
      %s22 = sphi 0, %s31
      %s23 = sphi 0, %s20
      %s24 = sphi 0, %s21
      %s25 = sphi 0, %s22
      %s26 = sphi 0, %s23
      %s27 = sphi 0, %s24
      %s28 = sphi 0, %s25
      %s46 = sphi 0, %s48
      %s49 = sphi 0, %s46
      %s50 = sphi 0, %s49
      %s66 = sphi 0, %s50
      %s74 = sphi 0, %s76
      %s77 = sphi 0, %s74
      %s78 = sphi 0, %s77
      %s94 = sphi 0, %s78
    $region4: #{tpu_custom_call.1} parent=1 // loop_header_branch
      %16 = sbr.rel (%p14) target = $region8
    $region5: #{tpu_custom_call.1} parent=1 // loop_body
      %s18 = ssub.s32 %s13, 1
      %s19 = ssub.s32 %s13, 2
      %s29 = sadd.s32 1, %s22
      %p30 = scmp.ge.s32.totalorder %s29, 1
      %s31 = scalar_select %p30, 0, %s29
      %s32 = sadd.s32 1, %s21
      %s33 = scalar_select %p30, %s32, %s21
      %p34 = scmp.ge.s32.totalorder %s33, 1
      %s35 = scalar_select %p34, 0, %s33
      %s36 = sadd.s32 1, %s20
      %s37 = scalar_select %p34, %s36, %s20
      %p38 = scmp.ge.s32.totalorder %s37, 2
      %s39 = scalar_select %p38, 0, %s37
      %s40 = ssub.s32 %s20, %s39
      %s41 = ssub.s32 %s22, %s31
      %s42 = sor.u32 %s40, %s41
      %s43 = ssub.s32 %s21, %s35
      %s44 = sor.u32 %s42, %s43
      %p45 = scmp.eq.s32.totalorder %s44, 0
      %s47 = sadd.s32 %s46, 1
      %s48 = scalar_select %p45, %s46, %s47
      %p51 = pneg %p45
      %p52 = scmp.eq.s32.totalorder %s13, 1
      %p53 = por %p51, %p52
      %p54 = scmp.ne.s32.totalorder %s46, %s49
      %p55 = scmp.eq.s32.totalorder %s13, 0
      %p56 = por %p54, %p55
      %p57 = scmp.ne.s32.totalorder %s46, %s49
      %p58 = scmp.eq.s32.totalorder %s18, 1
      %p59 = por %p57, %p58
      %p60 = scmp.ne.s32.totalorder %s49, %s50
      %p61 = scmp.eq.s32.totalorder %s18, 0
      %p62 = por %p60, %p61
      %p63 = scmp.ne.s32.totalorder %s49, %s50
      %p64 = scmp.eq.s32.totalorder %s19, 1
      %p65 = por %p63, %p64
      %p67 = scmp.ne.s32.totalorder %s50, %s66
      %p68 = scmp.eq.s32.totalorder %s19, 0
      %p69 = por %p67, %p68
      %s70 = ssub.s32 %s20, %s39
      %s71 = ssub.s32 %s21, %s35
      %s72 = sor.u32 %s70, %s71
      %p73 = scmp.eq.s32.totalorder %s72, 0
      %s75 = sadd.s32 %s74, 1
      %s76 = scalar_select %p73, %s74, %s75
      %p79 = pneg %p73
      %p80 = scmp.eq.s32.totalorder %s13, 1
      %p81 = por %p79, %p80
      %p82 = scmp.ne.s32.totalorder %s74, %s77
      %p83 = scmp.eq.s32.totalorder %s13, 0
      %p84 = por %p82, %p83
      %p85 = scmp.ne.s32.totalorder %s74, %s77
      %p86 = scmp.eq.s32.totalorder %s18, 1
      %p87 = por %p85, %p86
      %p88 = scmp.ne.s32.totalorder %s77, %s78
      %p89 = scmp.eq.s32.totalorder %s18, 0
      %p90 = por %p88, %p89
      %p91 = scmp.ne.s32.totalorder %s77, %s78
      %p92 = scmp.eq.s32.totalorder %s19, 1
      %p93 = por %p91, %p92
      %p95 = scmp.ne.s32.totalorder %s78, %s94
      %p96 = scmp.eq.s32.totalorder %s19, 0
      %p97 = por %p95, %p96
      %p98 = scmp.le.s32.totalorder 1, %s13
      %p99 = scmp.lt.s32.totalorder %s13, 3
      %p100 = pnand %p98, %p99
      %p101 = pneg %p100
      // Predicated region
      $region9: #{tpu_custom_call.1} parent=5 // pred_check
        _
      $region10: #{tpu_custom_call.1} parent=5 // pred_check_branch
        %103 = sbr.rel (%p100) target = $region12
      $region11: #{tpu_custom_call.1} parent=5 // pred_region
        %s104 = ssub.s32 %s13, 1
      $region12: #{tpu_custom_call.1} parent=5 // pred_fallthru
        _
      %p105 = scmp.lt.s32.totalorder %s13, 2
      // Predicated region
      $region13: #{tpu_custom_call.1} parent=5 // pred_check
        %p106 = pneg %p105
      $region14: #{tpu_custom_call.1} parent=5 // pred_check_branch
        %108 = sbr.rel (%p106) target = $region16
      $region15: #{tpu_custom_call.1} parent=5 // pred_region
        // Predicated region
        $region17: #{tpu_custom_call.1} parent=15 // pred_check
          %p109 = pneg %p56
        $region18: #{tpu_custom_call.1} parent=15 // pred_check_branch
          %111 = sbr.rel (%p109) target = $region20
        $region19: #{tpu_custom_call.1} parent=15 // pred_region
          %s112 = sand.u32 %s46, 1
          %s113 = scalar_lea.sflag [#allocation3], %s112
          %s114 = sand.u32 %s46, 1
          %s115 = smul.addr %s114, 8
          %s116 = scalar_lea.vmem [#allocation2], %s115
          %s117 = smul.u32 2, %s21
          %119 = vsyncadd %s113, 0
          %s120 = smul.addr %s22, 2
          %s121 = sadd.s32 %s117, %s120
          %s122 = smul.addr %s20, 2
          %s123 = sadd.s32 %s121, %s122
          %s124 = smul.addr %s123, 4
          %s125 = scalar_lea.hbm %s0, %s124
          %s127 = sshll.u32 %s125, 4
          %s128 = int_to_ptr.hbm [resolvable:$true] %s127
          %s129 = sshll.u32 %s116, 4
          %s130 = int_to_ptr.vmem [resolvable:$true] %s129
          %132 = dma.hbm_to_vmem [thread:$0]  %s128, 128, %s130, %s113
        $region20: #{tpu_custom_call.1} parent=15 // pred_fallthru
          _
      $region16: #{tpu_custom_call.1} parent=5 // pred_fallthru
        _
      %p133 = scmp.le.s32.totalorder 1, %s13
      %p134 = scmp.lt.s32.totalorder %s13, 3
      %p135 = pnand %p133, %p134
      %p136 = pneg %p135
      // Predicated region
      $region21: #{tpu_custom_call.1} parent=5 // pred_check
        _
      $region22: #{tpu_custom_call.1} parent=5 // pred_check_branch
        %138 = sbr.rel (%p135) target = $region24
      $region23: #{tpu_custom_call.1} parent=5 // pred_region
        %s139 = ssub.s32 %s13, 1
        %s140 = sand.u32 %s49, 1
        %s141 = scalar_lea.sflag [#allocation3], %s140
        %s142 = sand.u32 %s49, 1
        %s143 = smul.addr %s142, 8
        %s144 = scalar_lea.vmem [#allocation2], %s143
        // Predicated region
        $region25: #{tpu_custom_call.1} parent=23 // pred_check
          %p145 = pneg %p62
        $region26: #{tpu_custom_call.1} parent=23 // pred_check_branch
          %147 = sbr.rel (%p145) target = $region28
        $region27: #{tpu_custom_call.1} parent=23 // pred_region
          %149 = dma.done %s141, 128
        $region28: #{tpu_custom_call.1} parent=23 // pred_fallthru
          _
        %s150 = sand.u32 %s49, 1
        %s151 = scalar_lea.sflag [#allocation3], %s150
        %s152 = sand.u32 %s49, 1
        %s153 = smul.addr %s152, 8
        %s154 = scalar_lea.vmem [#allocation2], %s153
        %p155 = pneg %p62
        %p156 = pneg %p59
        %p157 = pneg %p90
        %p158 = pneg %p87
        %s159 = sand.u32 %s77, 1
        %s160 = scalar_lea.sflag [#allocation4], %s159
        %s161 = sand.u32 %s77, 1
        %s162 = smul.addr %s161, 4
        %s163 = scalar_lea.vmem [#allocation5], %s162
        %s164 = smul.u32 2, %s24
        %s165 = smul.u32 2, %s24
        %v166 = vld [vmem:[%s144] sm:$0xff]
        %168 = vst [vmem:[#allocation1] ss:$2 sm:$0xff] %v166
        %v169 = vld.sshfl [vmem:[#allocation1] sm:$0xff pattern:$0x75316420]
        %v170 = vld.sshfl [vmem:[#allocation1 + $0x8] sm:$0xff pattern:$0x75316420]
        %vm173 = vcmask 1043456
        %v174 = vsel %vm173, %v169, -inf
        %v175 = vrot.slane %v174, 4
        %v176 = vmax.f32 %v174, %v175
        %v177 = vrot.slane %v176, 2
        %v178 = vmax.f32 %v176, %v177
        %v179 = vrot.slane %v178, 1
        %v180 = vmax.f32 %v178, %v179
        %v181 = vsel %vm173, %v170, -inf
        %v182 = vrot.slane %v181, 4
        %v183 = vmax.f32 %v181, %v182
        %v184 = vrot.slane %v183, 2
        %v185 = vmax.f32 %v183, %v184
        %v186 = vrot.slane %v185, 1
        %v187 = vmax.f32 %v185, %v186
        %188 = vst [vmem:[#allocation1] ss:$2 sm:$0xff] %v166
        %v189 = vld.sshfl [vmem:[#allocation1] sm:$0xff pattern:$0x75316420]
        %v190 = vld.sshfl [vmem:[#allocation1 + $0x8] sm:$0xff pattern:$0x75316420]
        %v193 = vsel %vm173, %v189, 0.0
        %v194 = vrot.slane %v193, 4
        %v195 = vadd.f32 %v193, %v194
        %v196 = vrot.slane %v195, 2
        %v197 = vadd.f32 %v195, %v196
        %v198 = vrot.slane %v197, 1
        %v199 = vadd.f32 %v197, %v198
        %v200 = vsel %vm173, %v190, 0.0
        %v201 = vrot.slane %v200, 4
        %v202 = vadd.f32 %v200, %v201
        %v203 = vrot.slane %v202, 2
        %v204 = vadd.f32 %v202, %v203
        %v205 = vrot.slane %v204, 1
        %v206 = vadd.f32 %v204, %v205
        %v209 = vrot.slane %v187, 7
        %vm210 = vcmask 1040384
        %v211 = vsel %vm210, %v180, %v209
        %v213 = vlaneseq
        %vm214 = vcmp.ge.s32.totalorder %v213, 0
        %vm215 = vcmp.lt.s32.totalorder %v213, 256
        %vm216 = vmand %vm214, %vm215
        %217 = vst.msk [vmem:[%s163] ss:$2 sm:$0x3] %vm216, %v211
        %v218 = vmul.f32 %v199, 0.25
        %v219 = vmul.f32 %v206, 0.25
        %v222 = vrot.slane %v219, 7
        %v223 = vsel %vm210, %v218, %v222
        %s225 = scalar_lea.vmem %s163, 1 [#allocation5]
        %226 = vst.msk [vmem:[%s225] ss:$2 sm:$0x3] %vm216, %v223
        %s227 = sand.u32 %s77, 1
        %s228 = scalar_lea.sflag [#allocation4], %s227
        %s229 = sand.u32 %s77, 1
        %s230 = smul.addr %s229, 4
        %s231 = scalar_lea.vmem [#allocation5], %s230
        // Predicated region
        $region29: #{tpu_custom_call.1} parent=23 // pred_check
          %p232 = pneg %p87
        $region30: #{tpu_custom_call.1} parent=23 // pred_check_branch
          %234 = sbr.rel (%p232) target = $region32
        $region31: #{tpu_custom_call.1} parent=23 // pred_region
          %s235 = smul.u32 2, %s24
          %237 = vsyncadd %s228, 0
          %s238 = smul.addr %s23, 2
          %s239 = sadd.s32 %s235, %s238
          %s240 = smul.addr %s239, 2
          %s241 = scalar_lea.hbm %s1, %s240
          %s243 = sshll.u32 %s231, 4
          %s244 = int_to_ptr.vmem [resolvable:$true] %s243
          %s245 = sshll.u32 %s241, 4
          %s246 = int_to_ptr.hbm [resolvable:$true] %s245
          %248 = dma.vmem_to_hbm [thread:$0]  %s244, 64, %s246, %s228
        $region32: #{tpu_custom_call.1} parent=23 // pred_fallthru
          _
      $region24: #{tpu_custom_call.1} parent=5 // pred_fallthru
        _
      %p249 = scmp.le.s32.totalorder 2, %s13
      // Predicated region
      $region33: #{tpu_custom_call.1} parent=5 // pred_check
        %p250 = pneg %p249
      $region34: #{tpu_custom_call.1} parent=5 // pred_check_branch
        %252 = sbr.rel (%p250) target = $region36
      $region35: #{tpu_custom_call.1} parent=5 // pred_region
        %s253 = ssub.s32 %s13, 2
        // Predicated region
        $region37: #{tpu_custom_call.1} parent=35 // pred_check
          %p254 = pneg %p93
        $region38: #{tpu_custom_call.1} parent=35 // pred_check_branch
          %256 = sbr.rel (%p254) target = $region40
        $region39: #{tpu_custom_call.1} parent=35 // pred_region
          %s257 = sand.u32 %s78, 1
          %s258 = scalar_lea.sflag [#allocation4], %s257
          %s259 = sand.u32 %s78, 1
          %s260 = smul.addr %s259, 4
          %s261 = scalar_lea.vmem [#allocation5], %s260
          %263 = dma.done %s258, 64
        $region40: #{tpu_custom_call.1} parent=35 // pred_fallthru
          _
      $region36: #{tpu_custom_call.1} parent=5 // pred_fallthru
        _
    $region6: #{tpu_custom_call.1} parent=1 // loop_footer
      %s17 = sadd.s32 1, %s13
    $region7: #{tpu_custom_call.1} parent=1 // loop_footer_branch
      %12 = sbr.rel target = $region3
    $region8: #{tpu_custom_call.1} parent=1 // loop_exit
      _
    %264 = vsyncpa [#allocation3], 1
    %s265 = scalar_lea.sflag [#allocation3], 1
    %266 = vsyncpa %s265, 1
    %267 = vsyncpa [#allocation4], 1
    %s268 = scalar_lea.sflag [#allocation4], 1
    %269 = vsyncpa %s268, 1

</llo_original>
